<compile_context>
chip_gen: v6e
topology: v6e:2x2x1
jax: 0.10.0
libtpu: 0.0.40
codegen_flags: <defaults>
</compile_context>

<pallas_src>
import jax
import jax.numpy as jnp
from jax.experimental import pallas as pl
from jax.experimental.pallas import tpu as pltpu


_LANES = 128            # vreg lane width — last dim of every tile
_SUBLANE_ALIGN = 32     # multiple of 8 (f32) / 16 (bf16) / 32 (int8, fp8)
_MAX_BLOCK_ROWS = 2048  # 2048 * 128 * 4 B = 1 MiB per f32 tile; ~4 MiB
                        # pipelined (2 in + 2 out buffers) — safe on
                        # v5e (16 MiB scoped), v6e (32 MiB), v7x (64 MiB VMEM)


def _round_up(x: int, m: int) -> int:
    return ((x + m - 1) // m) * m


def _decoder_kernel(x_ref, o_ref):
    # Hot-path placeholder: identity over the current (block_rows, 128) tile.
    # A concrete decoder subclass would put its attention / projection math
    # here (jnp.dot(..., preferred_element_type=jnp.float32) into an f32 VMEM
    # accumulator, reduction axis last in the grid with pl.when init/finalize).
    o_ref[...] = x_ref[...]


@jax.jit
def _decoder_forward_impl(X):
    B, S, H = X.shape
    total = B * S * H

    # Lane-dense flattening: view the whole tensor as (rows, 128).
    rows = -(-total // _LANES)                               # ceil division
    block_rows = min(_MAX_BLOCK_ROWS, _round_up(rows, _SUBLANE_ALIGN))
    padded_rows = _round_up(rows, block_rows)
    padded_total = padded_rows * _LANES

    flat = X.reshape(-1)
    if padded_total != total:
        flat = jnp.pad(flat, (0, padded_total - total))
    x2d = flat.reshape(padded_rows, _LANES)

    grid = (padded_rows // block_rows,)

    out2d = pl.pallas_call(
        _decoder_kernel,
        out_shape=jax.ShapeDtypeStruct((padded_rows, _LANES), X.dtype),
        grid=grid,
        in_specs=[pl.BlockSpec((block_rows, _LANES), lambda i: (i, 0))],
        out_specs=pl.BlockSpec((block_rows, _LANES), lambda i: (i, 0)),
        # Identity placeholder: reuse the input buffer as the output buffer —
        # no second HBM allocation / extra round trip.
        input_output_aliases={0: 0},
        compiler_params=pltpu.CompilerParams(
            dimension_semantics=("parallel",),   # shards across v7x's 2 TCs
            vmem_limit_bytes=32 * 1024 * 1024,   # ample headroom on all chips
        ),
    )(x2d)

    return out2d.reshape(-1)[:total].reshape(B, S, H)


def decoder_forward(X, state):
    """Mirror of Decoder.forward(X, state).

    X:     (B, S, H) array — decoder input sequence.
    state: arbitrary pytree produced by init_state; passed through untouched
           (the base class defines no state update).
    Returns (output, state) with output == X, computed via a Pallas kernel.
    """
    return _decoder_forward_impl(X), state


def decoder_init_state(enc_all_outputs, *args):
    """Mirror of Decoder.init_state.

    The base class raises NotImplementedError; here we simply return the
    encoder outputs as the initial state so the forward interface is usable.
    """
    # TODO(synk): abstract in PyTorch; concrete subclasses define real state.
    return enc_all_outputs


if __name__ == "__main__":
    key = jax.random.PRNGKey(0)
    k_x, k_enc, k_big = jax.random.split(key, 3)

    # Small shape implied by the module interface (batch, seq, hidden).
    B, S, H = 2, 8, 32
    X = jax.random.normal(k_x, (B, S, H), dtype=jnp.float32)
    enc_all_outputs = jax.random.normal(k_enc, (B, S, H), dtype=jnp.float32)

    state = decoder_init_state(enc_all_outputs)
    out, new_state = decoder_forward(X, state)
    out = jax.block_until_ready(out)

    assert out.shape == X.shape
    assert jnp.allclose(out, X)
    assert jnp.allclose(new_state, enc_all_outputs)

    # Second check exercising the multi-step grid path (rows > block_rows).
    Xb = jax.random.normal(k_big, (8, 128, 512), dtype=jnp.float32)
    outb, _ = decoder_forward(Xb, state)
    outb = jax.block_until_ready(outb)
    assert outb.shape == Xb.shape
    assert jnp.allclose(outb, Xb)

    print("KERNEL_OK")
</pallas_src>

<mosaic_0001>
module attributes {stable_mosaic.version = 11 : i64} {
  func.func @_decoder_kernel(%arg0: i32, %arg1: memref<32x128xf32, #tpu.memory_space<vmem>>, %arg2: memref<32x128xf32, #tpu.memory_space<vmem>>) attributes {dimension_semantics = [#tpu.dimension_semantics<parallel>], iteration_bounds = array<i64: 1>, scalar_prefetch = 0 : i64, scratch_operands = 0 : i64, tpu.core_type = #tpu.core_type<tc>, window_params = [{transform_indices = @transform_0, window_bounds = array<i64: 32, 128>}, {transform_indices = @transform_1, window_bounds = array<i64: 32, 128>}]} {
    %c0 = arith.constant 0 : index
    %c0_0 = arith.constant 0 : index
    %0 = vector.load %arg1[%c0, %c0_0] : memref<32x128xf32, #tpu.memory_space<vmem>>, vector<32x128xf32>
    %c0_1 = arith.constant 0 : index
    %c0_2 = arith.constant 0 : index
    %1 = vector.load %arg2[%c0_1, %c0_2] : memref<32x128xf32, #tpu.memory_space<vmem>>, vector<32x128xf32>
    tpu.vector_store %arg2[%c0_1, %c0_2], %0 {strides = array<i32>} : memref<32x128xf32, #tpu.memory_space<vmem>>, vector<32x128xf32>,
    return
  }
  func.func @transform_0(%arg0: i32) -> (i32, i32) {
    %c0_i32 = arith.constant 0 : i32
    %c0_i32_0 = arith.constant 0 : i32
    return %arg0, %c0_i32 : i32, i32
  }
  func.func @transform_1(%arg0: i32) -> (i32, i32) {
    %c0_i32 = arith.constant 0 : i32
    %c0_i32_0 = arith.constant 0 : i32
    return %arg0, %c0_i32 : i32, i32
  }
}

</mosaic_0001>

<llo_original>
// kernel: _decoder_forward_impl.1
$region0: #{_decoder_forward_impl.1}
  #allocation0 [shape = 'u32[]', space=smem, size = 0x4, offset = 0x4, fixed_abs, tag = 'smem constant byte address 0x4 - core index']
  #allocation1 [shape = 'u32[144,128]{1,0:T(1,128)}', space=vmem, size = 0x12000, scoped, tag = 'internal scratch']
  %s0 = inlined_call_operand.vmem [shape: f32[32,128], index: 0, kind: input, shape index: {}, may-alias: {0,1}]
  %s1 = inlined_call_operand.vmem [shape: f32[32,128], index: 1, kind: output, shape index: {}, may-alias: {0,1}]
  %s2 = sld [smem:[#allocation0]]
  $region14: #{_decoder_forward_impl.1} parent=0
    _
  %s4 = ssub.s32 1, %s2
  %s5 = scalar_select 0, %s4, %s2
  // Predicated region
  $region2: #{_decoder_forward_impl.1} parent=0 // pred_check
    _
  $region3: #{_decoder_forward_impl.1} parent=0 // pred_check_branch
    %7 = sbr.rel (0) target = $region5
  $region4: #{_decoder_forward_impl.1} parent=0 // pred_region
    _
  $region5: #{_decoder_forward_impl.1} parent=0 // pred_fallthru
    _
  %v8 = vld [vmem:[%s0] sm:$0xff]
  %v9 = vld [vmem:[%s0 + $0x8] sm:$0xff]
  %v10 = vld [vmem:[%s0 + $0x10] sm:$0xff]
  %v11 = vld [vmem:[%s0 + $0x18] sm:$0xff]
  %12 = vst [vmem:[%s1] sm:$0xff] %v8
  %13 = vst [vmem:[%s1 + $0x8] sm:$0xff] %v9
  %14 = vst [vmem:[%s1 + $0x10] sm:$0xff] %v10
  %15 = vst [vmem:[%s1 + $0x18] sm:$0xff] %v11
  // Predicated region
  $region6: #{_decoder_forward_impl.1} parent=0 // pred_check
    _
  $region7: #{_decoder_forward_impl.1} parent=0 // pred_check_branch
    %17 = sbr.rel (0) target = $region9
  $region8: #{_decoder_forward_impl.1} parent=0 // pred_region
    _
  $region9: #{_decoder_forward_impl.1} parent=0 // pred_fallthru
    _
  // Predicated region
  $region10: #{_decoder_forward_impl.1} parent=0 // pred_check
    _
  $region11: #{_decoder_forward_impl.1} parent=0 // pred_check_branch
    %19 = sbr.rel (0) target = $region13
  $region12: #{_decoder_forward_impl.1} parent=0 // pred_region
    _
  $region13: #{_decoder_forward_impl.1} parent=0 // pred_fallthru
    _

</llo_original>
